<compile_context>
chip_gen: v5e
topology: v5e:2x2
jax: 0.10.0
libtpu: 0.0.40
codegen_flags: <defaults>
</compile_context>

<pallas_src>
import functools

import jax
import jax.numpy as jnp
import numpy as np
from jax.experimental import pallas as pl
from jax.experimental.pallas import tpu as pltpu


def _depth_to_space_kernel(x_ref, p_ref, o_ref, *, bs, n_groups, n_splits):
    """One (batch, row-tile) grid step.

    x_ref: (bs*bs, TR, W)   input phases; phase p = s*bs + r, rows = (d, h), lanes = w
    p_ref: (Kg, Kg) bf16    0/1 lane-scatter matrix, shared by every group
    o_ref: (TR, bs*bs*W)    output; rows = (d, h), lanes = (s, w, r) interleaved
    """
    phases = bs * bs
    pg = phases // n_groups            # phases handled by one matmul group
    pmat = p_ref[...]                  # (pg*W, pg*W), exact 0/1 in bf16

    group_outs = []
    for g in range(n_groups):
        # Lane-concat the pg phase slabs -> (TR, pg*W): folds the phase
        # reduction into the matmul K dim (no per-phase VPU adds).
        if pg == 1:
            xg = x_ref[g]
        else:
            xg = jnp.concatenate([x_ref[g * pg + q] for q in range(pg)], axis=-1)

        if n_splits == 1:
            # bf16 input: one MXU pass, exact (P is 0/1, accumulation in f32).
            acc = jnp.dot(xg, pmat, preferred_element_type=jnp.float32)
        else:
            # f32 / f16 input: split x into bf16 chunks (hi, mid, lo) and run
            # n_splits one-pass dots against the exact bf16 P.  The ordered sum
            # ((hi + mid) + lo) reconstructs the f32 value exactly for normal
            # floats (P selects exactly one input element per output column).
            rem = xg.astype(jnp.float32)
            acc = None
            for i in range(n_splits):
                part = rem.astype(jnp.bfloat16)
                contrib = jnp.dot(part, pmat, preferred_element_type=jnp.float32)
                acc = contrib if acc is None else acc + contrib
                if i + 1 < n_splits:
                    rem = rem - part.astype(jnp.float32)
        group_outs.append(acc)

    out = group_outs[0] if n_groups == 1 else jnp.concatenate(group_outs, axis=-1)
    # Single lane-dense, full-width store per step (last block dim == full dim).
    o_ref[...] = out.astype(o_ref.dtype)


def _pick_row_tile(rows, target):
    """Largest tile that divides `rows`, is a multiple of 8 and <= target."""
    if rows <= target:
        return rows
    t = (target // 8) * 8
    while t >= 8:
        if rows % t == 0:
            return t
        t -= 8
    return rows   # no aligned divisor; fall back to the full row extent


def depth_to_space(x_nchw, block_size, *, row_tile_target=1024):
    """DepthToSpace forward. x: (B, C, H, W) NCHW, C divisible by block_size**2."""
    bs = int(block_size)
    B, C, H, W = x_nchw.shape
    assert C % (bs * bs) == 0, "channels must be divisible by block_size**2"
    if bs == 1:
        return x_nchw
    dtype = x_nchw.dtype
    assert jnp.issubdtype(dtype, jnp.floating), (
        "MXU-scatter DepthToSpace kernel supports floating dtypes only")
    # TODO(synk): integer/bool inputs would need a non-MXU data-movement path.

    od = C // (bs * bs)
    rows = od * H
    out_w = bs * bs * W

    # MXU passes required for an exact permutation at this dtype.
    if dtype == jnp.bfloat16:
        n_splits = 1
    elif dtype == jnp.float16:
        n_splits = 2
    else:
        n_splits = 3                      # float32

    # Group the bs*bs phases into matmul groups: one fused matmul while the
    # contraction still fits an MXU tile, otherwise bs matmuls with K = bs*W.
    n_groups = 1 if bs * bs * W <= 256 else bs
    pg = (bs * bs) // n_groups
    kg = pg * W

    # 0/1 lane-scatter matrix shared by every group (exactly representable in
    # bf16):  P[q*W + w, (q // bs)*W*bs + w*bs + (q % bs)] = 1.
    p_np = np.zeros((kg, kg), np.float32)
    w_idx = np.arange(W)
    for q in range(pg):
        p_np[q * W + w_idx, (q // bs) * (W * bs) + w_idx * bs + (q % bs)] = 1.0
    p_mat = jnp.asarray(p_np, dtype=jnp.bfloat16)
    # P is tiny (2*kg*kg bytes); default double-buffering of this constant
    # operand costs negligible VMEM, so no pipeline_mode override.

    # Row tiling over the od*H row dim: caps VMEM and provides a second
    # parallel grid axis (keeps both v7x TensorCores busy at small batch).
    tr = _pick_row_tile(rows, int(row_tile_target))
    n_tiles = rows // tr

    # Free reshape (adjacent dims only): c = (s*bs + r)*od + d splits into
    # phase p = s*bs + r (major) and d; (d, H) merge into the row dim.
    x_in = x_nchw.reshape(B, bs * bs, rows, W)

    # VMEM budget: double-buffered in/out blocks + P + in-kernel temporaries.
    isz = np.dtype(dtype).itemsize
    blk = tr * bs * bs * W * isz          # one input block == one output block
    p_bytes = kg * kg * 2
    est = 10 * blk + 2 * p_bytes + (4 << 20)
    vmem_limit = int(min(max(est, 32 << 20), 64 << 20))

    kernel = functools.partial(_depth_to_space_kernel, bs=bs,
                               n_groups=n_groups, n_splits=n_splits)

    out2d = pl.pallas_call(
        kernel,
        out_shape=jax.ShapeDtypeStruct((B, rows, out_w), dtype),
        grid_spec=pltpu.PrefetchScalarGridSpec(
            num_scalar_prefetch=0,
            grid=(B, n_tiles),
            in_specs=[
                pl.BlockSpec((pl.Squeezed(), bs * bs, tr, W),
                             lambda b, t: (b, 0, t, 0)),
                pl.BlockSpec((kg, kg), lambda b, t: (0, 0)),
            ],
            out_specs=pl.BlockSpec((pl.Squeezed(), tr, out_w),
                                   lambda b, t: (b, t, 0)),
        ),
        compiler_params=pltpu.CompilerParams(
            dimension_semantics=("parallel", "parallel"),
            vmem_limit_bytes=vmem_limit),
    )(x_in, p_mat)

    # Free reshapes back to NCHW depth-to-space output:
    # (B, od*H, bs*W*bs) == (B, od, H, bs, W, bs) -> (B, od, H*bs, W*bs).
    return out2d.reshape(B, od, H * bs, W * bs)


def reference(x_nchw, block_size):
    """Pure-JAX reference matching the PyTorch DepthToSpace module."""
    bs = block_size
    B, C, H, W = x_nchw.shape
    od = C // (bs * bs)
    x6 = x_nchw.reshape(B, bs, bs, od, H, W)           # (b, s, r, d, h, w)
    t = jnp.transpose(x6, (0, 3, 4, 1, 5, 2))          # (b, d, h, s, w, r)
    return t.reshape(B, od, H * bs, W * bs)


if __name__ == "__main__":
    key = jax.random.PRNGKey(0)
    configs = [
        # (shape, block_size, dtype, row_tile_target)
        ((2, 4, 16, 16), 2, jnp.float32, 1024),    # od=1, fused single-group matmul
        ((2, 8, 16, 16), 2, jnp.float32, 8),       # od=2, exercises 2-axis row tiling
        ((2, 32, 8, 8), 4, jnp.float32, 1024),     # block_size = 4
        ((2, 16, 8, 128), 2, jnp.bfloat16, 1024),  # W=128 -> per-s groups, bf16 1-pass
    ]
    for shape, bs, dt, tgt in configs:
        key, sub = jax.random.split(key)
        x = jax.random.normal(sub, shape, jnp.float32).astype(dt)
        out = depth_to_space(x, bs, row_tile_target=tgt)
        out = jax.block_until_ready(out)
        ref = reference(x, bs)
        np.testing.assert_allclose(
            np.array(out.astype(jnp.float32)),
            np.array(ref.astype(jnp.float32)),
            rtol=1e-6, atol=1e-6)
    print("KERNEL_OK")
</pallas_src>

<mosaic_0001>
module attributes {stable_mosaic.version = 11 : i64} {
  func.func @_depth_to_space_kernel(%arg0: i32, %arg1: i32, %arg2: memref<1x4x16x16xf32, #tpu.memory_space<vmem>>, %arg3: memref<64x64xbf16, #tpu.memory_space<vmem>>, %arg4: memref<1x16x64xf32, #tpu.memory_space<vmem>>) attributes {dimension_semantics = [#tpu.dimension_semantics<parallel>, #tpu.dimension_semantics<parallel>], iteration_bounds = array<i64: 2, 1>, scalar_prefetch = 0 : i64, scratch_operands = 0 : i64, tpu.core_type = #tpu.core_type<tc>, window_params = [{transform_indices = @transform_0, window_bounds = array<i64: 1, 4, 16, 16>}, {pipeline_mode = #tpu.pipeline_mode<synchronous>, transform_indices = @transform_1, window_bounds = array<i64: 64, 64>}, {transform_indices = @transform_2, window_bounds = array<i64: 1, 16, 64>}]} {
    %c0 = arith.constant 0 : index
    %c0_0 = arith.constant 0 : index
    %0 = vector.load %arg3[%c0, %c0_0] : memref<64x64xbf16, #tpu.memory_space<vmem>>, vector<64x64xbf16>
    %c0_1 = arith.constant 0 : index
    %c0_2 = arith.constant 0 : index
    %c0_3 = arith.constant 0 : index
    %c0_4 = arith.constant 0 : index
    %1 = vector.load %arg2[%c0_1, %c0_2, %c0_3, %c0_4] : memref<1x4x16x16xf32, #tpu.memory_space<vmem>>, vector<1x1x16x16xf32>
    %2 = vector.shape_cast %1 : vector<1x1x16x16xf32> to vector<16x16xf32>
    %c0_5 = arith.constant 0 : index
    %c1 = arith.constant 1 : index
    %c0_6 = arith.constant 0 : index
    %c0_7 = arith.constant 0 : index
    %3 = vector.load %arg2[%c0_5, %c1, %c0_6, %c0_7] : memref<1x4x16x16xf32, #tpu.memory_space<vmem>>, vector<1x1x16x16xf32>
    %4 = vector.shape_cast %3 : vector<1x1x16x16xf32> to vector<16x16xf32>
    %c0_8 = arith.constant 0 : index
    %c2 = arith.constant 2 : index
    %c0_9 = arith.constant 0 : index
    %c0_10 = arith.constant 0 : index
    %5 = vector.load %arg2[%c0_8, %c2, %c0_9, %c0_10] : memref<1x4x16x16xf32, #tpu.memory_space<vmem>>, vector<1x1x16x16xf32>
    %6 = vector.shape_cast %5 : vector<1x1x16x16xf32> to vector<16x16xf32>
    %c0_11 = arith.constant 0 : index
    %c3 = arith.constant 3 : index
    %c0_12 = arith.constant 0 : index
    %c0_13 = arith.constant 0 : index
    %7 = vector.load %arg2[%c0_11, %c3, %c0_12, %c0_13] : memref<1x4x16x16xf32, #tpu.memory_space<vmem>>, vector<1x1x16x16xf32>
    %8 = vector.shape_cast %7 : vector<1x1x16x16xf32> to vector<16x16xf32>
    %9 = tpu.concatenate %2, %4, %6, %8 in 1 : vector<16x16xf32>, vector<16x16xf32>, vector<16x16xf32>, vector<16x16xf32> -> vector<16x64xf32>
    %10 = arith.truncf %9 : vector<16x64xf32> to vector<16x64xbf16>
    %cst = arith.constant dense<0.000000e+00> : vector<16x64xf32>
    %11 = tpu.matmul %10, %0, %cst {dimension_numbers = #tpu.dot_dimension_numbers<[1], [0], [0], [1], [0, 0, 1, 1], [], []>} : vector<16x64xbf16>, vector<64x64xbf16>, vector<16x64xf32> -> vector<16x64xf32>
    %12 = arith.extf %10 : vector<16x64xbf16> to vector<16x64xf32>
    %13 = arith.subf %9, %12 : vector<16x64xf32>
    %14 = arith.truncf %13 : vector<16x64xf32> to vector<16x64xbf16>
    %cst_14 = arith.constant dense<0.000000e+00> : vector<16x64xf32>
    %15 = tpu.matmul %14, %0, %cst_14 {dimension_numbers = #tpu.dot_dimension_numbers<[1], [0], [0], [1], [0, 0, 1, 1], [], []>} : vector<16x64xbf16>, vector<64x64xbf16>, vector<16x64xf32> -> vector<16x64xf32>
    %16 = arith.addf %11, %15 : vector<16x64xf32>
    %17 = arith.extf %14 : vector<16x64xbf16> to vector<16x64xf32>
    %18 = arith.subf %13, %17 : vector<16x64xf32>
    %19 = arith.truncf %18 : vector<16x64xf32> to vector<16x64xbf16>
    %cst_15 = arith.constant dense<0.000000e+00> : vector<16x64xf32>
    %20 = tpu.matmul %19, %0, %cst_15 {dimension_numbers = #tpu.dot_dimension_numbers<[1], [0], [0], [1], [0, 0, 1, 1], [], []>} : vector<16x64xbf16>, vector<64x64xbf16>, vector<16x64xf32> -> vector<16x64xf32>
    %21 = arith.addf %16, %20 : vector<16x64xf32>
    %c0_16 = arith.constant 0 : index
    %c0_17 = arith.constant 0 : index
    %c0_18 = arith.constant 0 : index
    %22 = vector.load %arg4[%c0_16, %c0_17, %c0_18] : memref<1x16x64xf32, #tpu.memory_space<vmem>>, vector<1x16x64xf32>
    %23 = vector.shape_cast %22 : vector<1x16x64xf32> to vector<16x64xf32>
    %24 = vector.shape_cast %21 : vector<16x64xf32> to vector<1x16x64xf32>
    tpu.vector_store %arg4[%c0_16, %c0_17, %c0_18], %24 {strides = array<i32>} : memref<1x16x64xf32, #tpu.memory_space<vmem>>, vector<1x16x64xf32>,
    return
  }
  func.func @transform_0(%arg0: i32, %arg1: i32) -> (i32, i32, i32, i32) {
    %c0_i32 = arith.constant 0 : i32
    %c0_i32_0 = arith.constant 0 : i32
    %c0_i32_1 = arith.constant 0 : i32
    return %arg0, %c0_i32, %arg1, %c0_i32_0 : i32, i32, i32, i32
  }
  func.func @transform_1(%arg0: i32, %arg1: i32) -> (i32, i32) {
    %c0_i32 = arith.constant 0 : i32
    %c0_i32_0 = arith.constant 0 : i32
    %c0_i32_1 = arith.constant 0 : i32
    return %c0_i32, %c0_i32_0 : i32, i32
  }
  func.func @transform_2(%arg0: i32, %arg1: i32) -> (i32, i32, i32) {
    %c0_i32 = arith.constant 0 : i32
    %c0_i32_0 = arith.constant 0 : i32
    return %arg0, %arg1, %c0_i32 : i32, i32, i32
  }
}

</mosaic_0001>

<llo_original>
// kernel: tpu_custom_call.1
$region0: #{tpu_custom_call.1}
  #allocation0 [shape = 'u32[]', space=smem, size = 0x4, offset = 0x4, fixed_abs, tag = 'smem constant byte address 0x4 - core index']
  #allocation1 [shape = 'u32[72,128]{1,0:T(1,128)}', space=vmem, size = 0x9000, scoped, tag = 'internal scratch']
  %s0 = inlined_call_operand.hbm [shape: f32[2,4,16,16], index: 0, kind: input, shape index: {}]
  %s1 = inlined_call_operand.hbm [shape: bf16[64,64], index: 1, kind: input, shape index: {}]
  %s2 = inlined_call_operand.hbm [shape: f32[2,16,64], index: 2, kind: output, shape index: {}]
  %s3 = sld [smem:[#allocation0]]
  $region49: #{tpu_custom_call.1} parent=0
    _
  %s5 = ssub.s32 1, %s3
  %s6 = scalar_select 0, %s5, %s3
  $region1: #{tpu_custom_call.1} parent=0
    #allocation2 [shape = 'u8[65536]{0}', space=vmem, size = 0x10000, scoped, tag = 'input window, operand 0']
    #allocation3 [shape = 's32[2]{0}', space=sflag, size = 0x8, scoped, tag = 'scoped memory for tpu_custom_call.1']
    #allocation4 [shape = 's32[2]{0}', space=sflag, size = 0x8, scoped, tag = 'scoped memory for tpu_custom_call.1']
    #allocation5 [shape = 'u8[16384]{0}', space=vmem, size = 0x4000, scoped, tag = 'input window, operand 1, single buffered']
    #allocation6 [shape = 's32[1]{0}', space=sflag, size = 0x4, scoped, tag = 'scoped memory for tpu_custom_call.1']
    #allocation7 [shape = 'u8[16384]{0}', space=vmem, size = 0x4000, scoped, tag = 'output window, operand 0']
    %7 = vsyncpa [#allocation3], 0
    %s8 = scalar_lea.sflag [#allocation3], 1
    %9 = vsyncpa %s8, 0
    %10 = vsyncpa [#allocation6], 0
    %11 = vsyncpa [#allocation4], 0
    %s12 = scalar_lea.sflag [#allocation4], 1
    %13 = vsyncpa %s12, 0
    loop: start=0, step=1, limit=4
    $region2: #{tpu_custom_call.1} parent=1 // loop_pre_header
      _
    $region3: #{tpu_custom_call.1} parent=1 // loop_header
      %s15 = sphi 0, %s19
      %p16 = scmp.ge.s32.totalorder %s15, 4
      %s22 = sphi 0, %s34
      %s23 = sphi 0, %s30
      %s24 = sphi 0, %s22
      %s25 = sphi 0, %s23
      %s26 = sphi 0, %s24
      %s27 = sphi 0, %s25
      %s39 = sphi 0, %s41
      %s42 = sphi 0, %s39
      %s43 = sphi 0, %s42
      %s59 = sphi 0, %s43
      %s63 = sphi 0, %s63
      %s65 = sphi 0, %s63
      %s66 = sphi 0, %s65
      %s80 = sphi 0, %s66
      %s88 = sphi 0, %s90
      %s91 = sphi 0, %s88
      %s92 = sphi 0, %s91
      %s108 = sphi 0, %s92
    $region4: #{tpu_custom_call.1} parent=1 // loop_header_branch
      %18 = sbr.rel (%p16) target = $region8
    $region5: #{tpu_custom_call.1} parent=1 // loop_body
      %s20 = ssub.s32 %s15, 1
      %s21 = ssub.s32 %s15, 2
      %s28 = sadd.s32 1, %s23
      %p29 = scmp.ge.s32.totalorder %s28, 1
      %s30 = scalar_select %p29, 0, %s28
      %s31 = sadd.s32 1, %s22
      %s32 = scalar_select %p29, %s31, %s22
      %p33 = scmp.ge.s32.totalorder %s32, 2
      %s34 = scalar_select %p33, 0, %s32
      %s35 = ssub.s32 %s22, %s34
      %s36 = ssub.s32 %s23, %s30
      %s37 = sor.u32 %s35, %s36
      %p38 = scmp.eq.s32.totalorder %s37, 0
      %s40 = sadd.s32 %s39, 1
      %s41 = scalar_select %p38, %s39, %s40
      %p44 = pneg %p38
      %p45 = scmp.eq.s32.totalorder %s15, 1
      %p46 = por %p44, %p45
      %p47 = scmp.ne.s32.totalorder %s39, %s42
      %p48 = scmp.eq.s32.totalorder %s15, 0
      %p49 = por %p47, %p48
      %p50 = scmp.ne.s32.totalorder %s39, %s42
      %p51 = scmp.eq.s32.totalorder %s20, 1
      %p52 = por %p50, %p51
      %p53 = scmp.ne.s32.totalorder %s42, %s43
      %p54 = scmp.eq.s32.totalorder %s20, 0
      %p55 = por %p53, %p54
      %p56 = scmp.ne.s32.totalorder %s42, %s43
      %p57 = scmp.eq.s32.totalorder %s21, 1
      %p58 = por %p56, %p57
      %p60 = scmp.ne.s32.totalorder %s43, %s59
      %p61 = scmp.eq.s32.totalorder %s21, 0
      %p62 = por %p60, %p61
      %s64 = sadd.s32 %s63, 1
      %p67 = scmp.eq.s32.totalorder %s15, 1
      %p68 = scmp.ne.s32.totalorder %s63, %s65
      %p69 = scmp.eq.s32.totalorder %s15, 0
      %p70 = por %p68, %p69
      %p71 = scmp.ne.s32.totalorder %s63, %s65
      %p72 = scmp.eq.s32.totalorder %s20, 1
      %p73 = por %p71, %p72
      %p74 = scmp.ne.s32.totalorder %s65, %s66
      %p75 = scmp.eq.s32.totalorder %s20, 0
      %p76 = por %p74, %p75
      %p77 = scmp.ne.s32.totalorder %s65, %s66
      %p78 = scmp.eq.s32.totalorder %s21, 1
      %p79 = por %p77, %p78
      %p81 = scmp.ne.s32.totalorder %s66, %s80
      %p82 = scmp.eq.s32.totalorder %s21, 0
      %p83 = por %p81, %p82
      %s84 = ssub.s32 %s22, %s34
      %s85 = ssub.s32 %s23, %s30
      %s86 = sor.u32 %s84, %s85
      %p87 = scmp.eq.s32.totalorder %s86, 0
      %s89 = sadd.s32 %s88, 1
      %s90 = scalar_select %p87, %s88, %s89
      %p93 = pneg %p87
      %p94 = scmp.eq.s32.totalorder %s15, 1
      %p95 = por %p93, %p94
      %p96 = scmp.ne.s32.totalorder %s88, %s91
      %p97 = scmp.eq.s32.totalorder %s15, 0
      %p98 = por %p96, %p97
      %p99 = scmp.ne.s32.totalorder %s88, %s91
      %p100 = scmp.eq.s32.totalorder %s20, 1
      %p101 = por %p99, %p100
      %p102 = scmp.ne.s32.totalorder %s91, %s92
      %p103 = scmp.eq.s32.totalorder %s20, 0
      %p104 = por %p102, %p103
      %p105 = scmp.ne.s32.totalorder %s91, %s92
      %p106 = scmp.eq.s32.totalorder %s21, 1
      %p107 = por %p105, %p106
      %p109 = scmp.ne.s32.totalorder %s92, %s108
      %p110 = scmp.eq.s32.totalorder %s21, 0
      %p111 = por %p109, %p110
      %p112 = scmp.le.s32.totalorder 1, %s15
      %p113 = scmp.lt.s32.totalorder %s15, 3
      %p114 = pnand %p112, %p113
      %p115 = pneg %p114
      // Predicated region
      $region9: #{tpu_custom_call.1} parent=5 // pred_check
        _
      $region10: #{tpu_custom_call.1} parent=5 // pred_check_branch
        %117 = sbr.rel (%p114) target = $region12
      $region11: #{tpu_custom_call.1} parent=5 // pred_region
        %s118 = ssub.s32 %s15, 1
        // Predicated region
        $region13: #{tpu_custom_call.1} parent=11 // pred_check
          %p119 = pneg %p76
        $region14: #{tpu_custom_call.1} parent=11 // pred_check_branch
          %121 = sbr.rel (%p119) target = $region16
        $region15: #{tpu_custom_call.1} parent=11 // pred_region
          %123 = vsyncadd [#allocation6], 0
          %s124 = sshll.u32 %s1, 4
          %s125 = int_to_ptr.hbm [resolvable:$true] %s124
          %s126 = sshll.u32 [#allocation5], 4
          %s127 = int_to_ptr.vmem [resolvable:$true] %s126
          %132 = dma.hbm_to_vmem [thread:$0]  %s125, 512, %s127, [#allocation6], 64, 64, 4
        $region16: #{tpu_custom_call.1} parent=11 // pred_fallthru
          _
      $region12: #{tpu_custom_call.1} parent=5 // pred_fallthru
        _
      %p133 = scmp.lt.s32.totalorder %s15, 2
      // Predicated region
      $region17: #{tpu_custom_call.1} parent=5 // pred_check
        %p134 = pneg %p133
      $region18: #{tpu_custom_call.1} parent=5 // pred_check_branch
        %136 = sbr.rel (%p134) target = $region20
      $region19: #{tpu_custom_call.1} parent=5 // pred_region
        // Predicated region
        $region21: #{tpu_custom_call.1} parent=19 // pred_check
          %p137 = pneg %p49
        $region22: #{tpu_custom_call.1} parent=19 // pred_check_branch
          %139 = sbr.rel (%p137) target = $region24
        $region23: #{tpu_custom_call.1} parent=19 // pred_region
          %s140 = sand.u32 %s39, 1
          %s141 = scalar_lea.sflag [#allocation3], %s140
          %s142 = sand.u32 %s39, 1
          %s143 = smul.addr %s142, 64
          %s144 = scalar_lea.vmem [#allocation2], %s143
          %s145 = smul.u32 2, %s23
          %147 = vsyncadd %s141, 0
          %s148 = smul.addr %s22, 8
          %s149 = sadd.s32 %s145, %s148
          %s150 = smul.addr %s149, 8
          %s151 = scalar_lea.hbm %s0, %s150
          %s152 = sshll.u32 %s151, 4
          %s153 = int_to_ptr.hbm [resolvable:$true] %s152
          %s154 = sshll.u32 %s144, 4
          %s155 = int_to_ptr.vmem [resolvable:$true] %s154
          %160 = dma.hbm_to_vmem [thread:$0]  %s153, 1024, %s155, %s141, 128, 128, 8
        $region24: #{tpu_custom_call.1} parent=19 // pred_fallthru
          _
      $region20: #{tpu_custom_call.1} parent=5 // pred_fallthru
        _
      %p161 = scmp.le.s32.totalorder 1, %s15
      %p162 = scmp.lt.s32.totalorder %s15, 3
      %p163 = pnand %p161, %p162
      %p164 = pneg %p163
      // Predicated region
      $region25: #{tpu_custom_call.1} parent=5 // pred_check
        _
      $region26: #{tpu_custom_call.1} parent=5 // pred_check_branch
        %166 = sbr.rel (%p163) target = $region28
      $region27: #{tpu_custom_call.1} parent=5 // pred_region
        %s167 = ssub.s32 %s15, 1
        %s168 = sand.u32 %s42, 1
        %s169 = scalar_lea.sflag [#allocation3], %s168
        %s170 = sand.u32 %s42, 1
        %s171 = smul.addr %s170, 64
        %s172 = scalar_lea.vmem [#allocation2], %s171
        // Predicated region
        $region29: #{tpu_custom_call.1} parent=27 // pred_check
          %p173 = pneg %p55
        $region30: #{tpu_custom_call.1} parent=27 // pred_check_branch
          %175 = sbr.rel (%p173) target = $region32
        $region31: #{tpu_custom_call.1} parent=27 // pred_region
          %177 = dma.done %s169, 1024
        $region32: #{tpu_custom_call.1} parent=27 // pred_fallthru
          _
        // Predicated region
        $region33: #{tpu_custom_call.1} parent=27 // pred_check
          %p178 = pneg %p76
        $region34: #{tpu_custom_call.1} parent=27 // pred_check_branch
          %180 = sbr.rel (%p178) target = $region36
        $region35: #{tpu_custom_call.1} parent=27 // pred_region
          %182 = dma.done [#allocation6], 512
        $region36: #{tpu_custom_call.1} parent=27 // pred_fallthru
          _
        %s183 = sand.u32 %s42, 1
        %s184 = scalar_lea.sflag [#allocation3], %s183
        %s185 = sand.u32 %s42, 1
        %s186 = smul.addr %s185, 64
        %s187 = scalar_lea.vmem [#allocation2], %s186
        %p188 = pneg %p55
        %p189 = pneg %p52
        %p190 = pneg %p76
        %p191 = pneg %p73
        %p192 = pneg %p104
        %p193 = pneg %p101
        %s194 = sand.u32 %s91, 1
        %s195 = scalar_lea.sflag [#allocation4], %s194
        %s196 = sand.u32 %s91, 1
        %s197 = smul.addr %s196, 16
        %s198 = scalar_lea.vmem [#allocation7], %s197
        %s199 = smul.u32 2, %s25
        %s200 = smul.u32 2, %s25
        %v202 = vld [vmem:[#allocation5] sm:$0xf]
        %v203 = vld [vmem:[#allocation5 + $0x4] sm:$0xf]
        %v204 = vld [vmem:[#allocation5 + $0x8] sm:$0xf]
        %v205 = vld [vmem:[#allocation5 + $0xc] sm:$0xf]
        %v206 = vld [vmem:[#allocation5 + $0x10] sm:$0xf]
        %v207 = vld [vmem:[#allocation5 + $0x14] sm:$0xf]
        %v208 = vld [vmem:[#allocation5 + $0x18] sm:$0xf]
        %v209 = vld [vmem:[#allocation5 + $0x1c] sm:$0xf]
        %v210 = vld [vmem:[%s172] sm:$0xff]
        %v211 = vld [vmem:[%s172 + $0x8] sm:$0xff]
        %s212 = scalar_lea.vmem %s172, 16 [#allocation2]
        %v213 = vld [vmem:[%s212] sm:$0xff]
        %v214 = vld [vmem:[%s212 + $0x8] sm:$0xff]
        %s215 = scalar_lea.vmem %s172, 32 [#allocation2]
        %v216 = vld [vmem:[%s215] sm:$0xff]
        %v217 = vld [vmem:[%s215 + $0x8] sm:$0xff]
        %s218 = scalar_lea.vmem %s172, 48 [#allocation2]
        %v219 = vld [vmem:[%s218] sm:$0xff]
        %v220 = vld [vmem:[%s218 + $0x8] sm:$0xff]
        %223 = vrot.lane.b32.xlu0 %v213, 16
        %v224 = vpop.permute.xlu0 %223
        %225 = vrot.lane.b32.xlu0 %v214, 16
        %v226 = vpop.permute.xlu0 %225
        %231 = vrot.lane.b32.xlu0 %v216, 32
        %v232 = vpop.permute.xlu0 %231
        %233 = vrot.lane.b32.xlu0 %v217, 32
        %v234 = vpop.permute.xlu0 %233
        %239 = vrot.lane.b32.xlu0 %v219, 48
        %v240 = vpop.permute.xlu0 %239
        %241 = vrot.lane.b32.xlu0 %v220, 48
        %v242 = vpop.permute.xlu0 %241
        %vm245 = vcmask 130048
        %v246 = vsel %vm245, %v210, %v224
        %v247 = vsel %vm245, %v211, %v226
        %vm248 = vcmask 261120
        %v249 = vsel %vm248, %v246, %v232
        %v250 = vsel %vm248, %v247, %v234
        %vm251 = vcmask 392192
        %v252 = vsel %vm251, %v249, %v240
        %v253 = vsel %vm251, %v250, %v242
        %v254 = vpack.c.bf16 %v252, %v252
        %v255 = vpack.c.bf16 %v253, %v253
        %v256 = vunpack.c.l.bf16 %v254
        %v257 = vunpack.c.l.bf16 %v255
        %v258 = vsub.f32 %v252, %v256
        %v259 = vsub.f32 %v253, %v257
        %v260 = vpack.c.bf16 %v258, %v258
        %v261 = vpack.c.bf16 %v259, %v259
        %v264 = vunpack.c.l.b16 %v260
        %v265 = vunpack.c.l.b16 %v261
        %v266 = vpack.c.b16 %v265, %v264
        %v275 = vunpack.c.l.b16 %v202
        %v276 = vunpack.c.l.b16 %v203
        %v277 = vunpack.c.l.b16 %v204
        %v278 = vunpack.c.l.b16 %v205
        %v279 = vunpack.c.l.b16 %v206
        %v280 = vunpack.c.l.b16 %v207
        %v281 = vunpack.c.l.b16 %v208
        %v282 = vunpack.c.l.b16 %v209
        %v283 = vpack.c.b16 %v276, %v275
        %v284 = vpack.c.b16 %v278, %v277
        %v285 = vpack.c.b16 %v280, %v279
        %v286 = vpack.c.b16 %v282, %v281
        %vm291 = vcmask 523264
        %v293 = vsel %vm291, %v266, 0
        %295 = vmatpush.bf16.msra.mxu0 0
        %296 = vmatpush.bf16.msra.mxu0 0
        %297 = vmatpush.bf16.msra.mxu0 0
        %298 = vmatpush.bf16.msra.mxu0 0
        %299 = vmatpush.bf16.msra.mxu0 %v286
        %300 = vmatpush.bf16.msra.mxu0 %v285
        %301 = vmatpush.bf16.msra.mxu0 %v284
        %302 = vmatpush.bf16.msra.mxu0 %v283
        %303 = vmatmul.bf16.gmra.mxu0 %v293
        %v304 = vpop.f32.mrf.mxu0
        %v305 = vadd.f32 0.0, %v304
        %v306 = vpop.f32.mrf.mxu0
        %v307 = vadd.f32 0.0, %v306
        %308 = vdwg.mxu0
        %v311 = vunpack.c.l.b16 %v254
        %v312 = vunpack.c.l.b16 %v255
        %v313 = vpack.c.b16 %v312, %v311
        %v315 = vsel %vm291, %v313, 0
        %317 = vmatpush.bf16.msra.mxu0 0
        %318 = vmatpush.bf16.msra.mxu0 0
        %319 = vmatpush.bf16.msra.mxu0 0
        %320 = vmatpush.bf16.msra.mxu0 0
        %321 = vmatpush.bf16.msra.mxu0 %v286
        %322 = vmatpush.bf16.msra.mxu0 %v285
        %323 = vmatpush.bf16.msra.mxu0 %v284
        %324 = vmatpush.bf16.msra.mxu0 %v283
        %325 = vmatmul.bf16.gmra.mxu0 %v315
        %v326 = vpop.f32.mrf.mxu0
        %v327 = vadd.f32 %v305, %v326
        %v328 = vpop.f32.mrf.mxu0
        %v329 = vadd.f32 %v307, %v328
        %330 = vdwg.mxu0
        %v331 = vunpack.c.l.bf16 %v260
        %v332 = vunpack.c.l.bf16 %v261
        %v333 = vsub.f32 %v258, %v331
        %v334 = vsub.f32 %v259, %v332
        %v335 = vpack.c.bf16 %v334, %v333
        %v337 = vsel %vm291, %v335, 0
        %339 = vmatpush.bf16.msra.mxu0 0
        %340 = vmatpush.bf16.msra.mxu0 0
        %341 = vmatpush.bf16.msra.mxu0 0
        %342 = vmatpush.bf16.msra.mxu0 0
        %343 = vmatpush.bf16.msra.mxu0 %v286
        %344 = vmatpush.bf16.msra.mxu0 %v285
        %345 = vmatpush.bf16.msra.mxu0 %v284
        %346 = vmatpush.bf16.msra.mxu0 %v283
        %347 = vmatmul.bf16.gmra.mxu0 %v337
        %v348 = vpop.f32.mrf.mxu0
        %v349 = vadd.f32 0.0, %v348
        %v350 = vpop.f32.mrf.mxu0
        %v351 = vadd.f32 0.0, %v350
        %352 = vdwg.mxu0
        %v353 = vadd.f32 %v327, %v349
        %v354 = vadd.f32 %v329, %v351
        %355 = vst.msk [vmem:[%s198] sm:$0xff] %vm291, %v353
        %356 = vst.msk [vmem:[%s198 + $0x8] sm:$0xff] %vm291, %v354
        %s357 = sand.u32 %s91, 1
        %s358 = scalar_lea.sflag [#allocation4], %s357
        %s359 = sand.u32 %s91, 1
        %s360 = smul.addr %s359, 16
        %s361 = scalar_lea.vmem [#allocation7], %s360
        // Predicated region
        $region37: #{tpu_custom_call.1} parent=27 // pred_check
          %p362 = pneg %p101
        $region38: #{tpu_custom_call.1} parent=27 // pred_check_branch
          %364 = sbr.rel (%p362) target = $region40
        $region39: #{tpu_custom_call.1} parent=27 // pred_region
          %s365 = smul.u32 2, %s25
          %367 = vsyncadd %s358, 0
          %s368 = smul.addr %s24, 2
          %s369 = sadd.s32 %s365, %s368
          %s370 = smul.addr %s369, 8
          %s371 = scalar_lea.hbm %s2, %s370
          %s372 = sshll.u32 %s361, 4
          %s373 = int_to_ptr.vmem [resolvable:$true] %s372
          %s374 = sshll.u32 %s371, 4
          %s375 = int_to_ptr.hbm [resolvable:$true] %s374
          %380 = dma.vmem_to_hbm [thread:$0]  %s373, 256, %s375, %s358, 128, 128, 8
        $region40: #{tpu_custom_call.1} parent=27 // pred_fallthru
          _
      $region28: #{tpu_custom_call.1} parent=5 // pred_fallthru
        _
      %p381 = scmp.le.s32.totalorder 2, %s15
      // Predicated region
      $region41: #{tpu_custom_call.1} parent=5 // pred_check
        %p382 = pneg %p381
      $region42: #{tpu_custom_call.1} parent=5 // pred_check_branch
        %384 = sbr.rel (%p382) target = $region44
      $region43: #{tpu_custom_call.1} parent=5 // pred_region
        %s385 = ssub.s32 %s15, 2
        // Predicated region
        $region45: #{tpu_custom_call.1} parent=43 // pred_check
          %p386 = pneg %p107
        $region46: #{tpu_custom_call.1} parent=43 // pred_check_branch
          %388 = sbr.rel (%p386) target = $region48
        $region47: #{tpu_custom_call.1} parent=43 // pred_region
          %s389 = sand.u32 %s92, 1
          %s390 = scalar_lea.sflag [#allocation4], %s389
          %s391 = sand.u32 %s92, 1
          %s392 = smul.addr %s391, 16
          %s393 = scalar_lea.vmem [#allocation7], %s392
          %395 = dma.done %s390, 256
        $region48: #{tpu_custom_call.1} parent=43 // pred_fallthru
          _
      $region44: #{tpu_custom_call.1} parent=5 // pred_fallthru
        _
    $region6: #{tpu_custom_call.1} parent=1 // loop_footer
      %s19 = sadd.s32 1, %s15
    $region7: #{tpu_custom_call.1} parent=1 // loop_footer_branch
      %14 = sbr.rel target = $region3
    $region8: #{tpu_custom_call.1} parent=1 // loop_exit
      _
    %396 = vsyncpa [#allocation3], 1
    %s397 = scalar_lea.sflag [#allocation3], 1
    %398 = vsyncpa %s397, 1
    %399 = vsyncpa [#allocation6], 1
    %400 = vsyncpa [#allocation4], 1
    %s401 = scalar_lea.sflag [#allocation4], 1
    %402 = vsyncpa %s401, 1

</llo_original>
